<compile_context>
chip_gen: v7x
topology: tpu7x:2x2x1
jax: 0.10.0
libtpu: 0.0.40
codegen_flags: <defaults>
</compile_context>

<pallas_src>
import jax
import jax.numpy as jnp
from jax.experimental import pallas as pl
from jax.experimental.pallas import tpu as pltpu


def ld_concat_kernel(x_ref, w1_ref, b1_ref, wo_ref, bo_ref, o_ref):
    """One batch tile of the LD_CONCAT forward.

    x_ref : (N, TB, L)   per-neighbor inputs for this batch tile
    w1_ref: (N, L, H)    h1.weight^T split per neighbor (block i = W1[:, i*L:(i+1)*L].T)
    b1_ref: (1, H)       h1.bias
    wo_ref: (H, L)       out.weight^T
    bo_ref: (1, L)       out.bias
    o_ref : (TB, L)
    """
    n_neighbs = x_ref.shape[0]
    tb = x_ref.shape[1]
    h_dim = w1_ref.shape[2]

    # Hoisted bias broadcast: initialize the f32 accumulator with b1 exactly once.
    h = jnp.broadcast_to(b1_ref[...], (tb, h_dim)).astype(jnp.float32)

    # concat-along-features followed by h1  ==  sum of per-neighbor partial matmuls.
    # Static (small) unrolled loop; relu is applied AFTER the sum (LD_CONCAT semantics).
    for i in range(n_neighbs):
        h = h + jnp.dot(x_ref[i], w1_ref[i], preferred_element_type=jnp.float32)

    h = jnp.maximum(h, 0.0)

    out = jnp.dot(h.astype(wo_ref.dtype), wo_ref[...],
                  preferred_element_type=jnp.float32)
    out = out + bo_ref[...]
    o_ref[...] = out.astype(o_ref.dtype)


def prepare_params(w1, b1, wo, bo, num_neighbs, compute_dtype=jnp.float32):
    """Preprocess PyTorch-layout parameters once (hoisted out of the per-call path).

    w1: (H, N*L)  b1: (H,)  wo: (L, H)  bo: (L,)
    """
    h_dim, nl = w1.shape
    num_labels = nl // num_neighbs
    # w1.T is (N*L, H); row-block i is W1[:, i*L:(i+1)*L].T of shape (L, H).
    w1_t = w1.T.reshape(num_neighbs, num_labels, h_dim).astype(compute_dtype)
    b1_2d = b1.reshape(1, h_dim).astype(jnp.float32)
    wo_t = wo.T.astype(compute_dtype)            # (H, L)
    bo_2d = bo.reshape(1, num_labels).astype(jnp.float32)
    return w1_t, b1_2d, wo_t, bo_2d


def ld_concat_forward(ld_input, params, *, block_b=256):
    """ld_input: (N, B, L) float; params from prepare_params."""
    w1_t, b1_2d, wo_t, bo_2d = params
    N, B, L = ld_input.shape
    H = w1_t.shape[2]

    x = ld_input.astype(w1_t.dtype)

    # Batch tiling: whole batch if small, otherwise 256-row tiles (multiple of 8,
    # small enough to fit comfortably in v7x's 64 MiB VMEM with double-buffering).
    tb = B if B <= block_b else block_b
    b_pad = pl.cdiv(B, tb) * tb
    if b_pad != B:
        x = jnp.pad(x, ((0, 0), (0, b_pad - B), (0, 0)))
    grid = (b_pad // tb,)

    flops = 2 * b_pad * (N * L) * H + 2 * b_pad * H * L
    bytes_accessed = int(
        x.size * x.dtype.itemsize
        + w1_t.size * w1_t.dtype.itemsize
        + wo_t.size * wo_t.dtype.itemsize
        + b1_2d.size * 4 + bo_2d.size * 4
        + b_pad * L * 4)

    out = pl.pallas_call(
        ld_concat_kernel,
        out_shape=jax.ShapeDtypeStruct((b_pad, L), jnp.float32),
        grid=grid,
        in_specs=[
            pl.BlockSpec((N, tb, L), lambda i: (0, i, 0)),   # x: tiled over batch
            pl.BlockSpec((N, L, H), lambda i: (0, 0, 0)),    # w1 (resident)
            pl.BlockSpec((1, H), lambda i: (0, 0)),          # b1
            pl.BlockSpec((H, L), lambda i: (0, 0)),          # wo
            pl.BlockSpec((1, L), lambda i: (0, 0)),          # bo
        ],
        out_specs=pl.BlockSpec((tb, L), lambda i: (i, 0)),
        compiler_params=pltpu.CompilerParams(
            dimension_semantics=("parallel",)),              # v7x: shard batch over 2 TCs
        cost_estimate=pl.CostEstimate(flops=flops, transcendentals=0,
                                      bytes_accessed=bytes_accessed),
    )(x, w1_t, b1_2d, wo_t, bo_2d)
    return out[:B]


def ld_concat_ref(ld_input, w1, b1, wo, bo):
    """Pure-JAX reference mirroring the PyTorch LD_CONCAT forward."""
    N = ld_input.shape[0]
    cat = jnp.concatenate([ld_input[i] for i in range(N)], axis=1)   # (B, N*L)
    h = jnp.maximum(cat @ w1.T + b1, 0.0)
    return h @ wo.T + bo


if __name__ == "__main__":
    num_neighbs = 3
    batch = 8
    num_labels = 16
    h1_dim = 32

    key = jax.random.PRNGKey(0)
    k_x, k_w1, k_b1, k_wo, k_bo, k_x2 = jax.random.split(key, 6)

    ld_input = jax.random.normal(k_x, (num_neighbs, batch, num_labels),
                                 dtype=jnp.float32)

    # PyTorch nn.Linear shapes: h1 (H, N*L), out (L, H).
    w1 = jax.random.normal(k_w1, (h1_dim, num_labels * num_neighbs),
                           dtype=jnp.float32) * 0.1
    b1 = jax.random.normal(k_b1, (h1_dim,), dtype=jnp.float32) * 0.1
    wo = jax.random.normal(k_wo, (num_labels, h1_dim), dtype=jnp.float32) * 0.1
    bo = jax.random.normal(k_bo, (num_labels,), dtype=jnp.float32) * 0.1

    ref = ld_concat_ref(ld_input, w1, b1, wo, bo)

    # 1) f32 path, single batch tile.
    params_f32 = prepare_params(w1, b1, wo, bo, num_neighbs, jnp.float32)
    out = jax.block_until_ready(ld_concat_forward(ld_input, params_f32))
    assert out.shape == (batch, num_labels)
    assert jnp.allclose(out, ref, atol=1e-4, rtol=1e-4)

    # 2) bf16 compute path (bf16 MXU inputs, f32 accumulation) -- looser tolerance.
    params_bf16 = prepare_params(w1, b1, wo, bo, num_neighbs, jnp.bfloat16)
    out_bf16 = jax.block_until_ready(ld_concat_forward(ld_input, params_bf16))
    assert jnp.allclose(out_bf16, ref, atol=1e-1, rtol=1e-1)

    # 3) Larger, non-multiple batch to exercise the batch grid + padding path.
    big_batch = 300
    ld_big = jax.random.normal(k_x2, (num_neighbs, big_batch, num_labels),
                               dtype=jnp.float32)
    out_big = jax.block_until_ready(ld_concat_forward(ld_big, params_f32))
    ref_big = ld_concat_ref(ld_big, w1, b1, wo, bo)
    assert out_big.shape == (big_batch, num_labels)
    assert jnp.allclose(out_big, ref_big, atol=1e-4, rtol=1e-4)

    print("KERNEL_OK")
</pallas_src>

<mosaic_0001>
module attributes {stable_mosaic.version = 11 : i64} {
  func.func @ld_concat_kernel(%arg0: i32, %arg1: memref<3x8x16xf32, #tpu.memory_space<vmem>>, %arg2: memref<3x16x32xf32, #tpu.memory_space<vmem>>, %arg3: memref<1x32xf32, #tpu.memory_space<vmem>>, %arg4: memref<32x16xf32, #tpu.memory_space<vmem>>, %arg5: memref<1x16xf32, #tpu.memory_space<vmem>>, %arg6: memref<8x16xf32, #tpu.memory_space<vmem>>) attributes {dimension_semantics = [#tpu.dimension_semantics<parallel>], iteration_bounds = array<i64: 1>, scalar_prefetch = 0 : i64, scratch_operands = 0 : i64, tpu.core_type = #tpu.core_type<tc>, window_params = [{transform_indices = @transform_0, window_bounds = array<i64: 3, 8, 16>}, {pipeline_mode = #tpu.pipeline_mode<synchronous>, transform_indices = @transform_1, window_bounds = array<i64: 3, 16, 32>}, {pipeline_mode = #tpu.pipeline_mode<synchronous>, transform_indices = @transform_2, window_bounds = array<i64: 1, 32>}, {pipeline_mode = #tpu.pipeline_mode<synchronous>, transform_indices = @transform_3, window_bounds = array<i64: 32, 16>}, {pipeline_mode = #tpu.pipeline_mode<synchronous>, transform_indices = @transform_4, window_bounds = array<i64: 1, 16>}, {transform_indices = @transform_5, window_bounds = array<i64: 8, 16>}]} {
    %c0 = arith.constant 0 : index
    %c0_0 = arith.constant 0 : index
    %0 = vector.load %arg3[%c0, %c0_0] : memref<1x32xf32, #tpu.memory_space<vmem>>, vector<1x32xf32>
    %1 = vector.shape_cast %0 : vector<1x32xf32> to vector<1x32xf32>
    %2 = vector.broadcast %1 : vector<1x32xf32> to vector<8x32xf32>
    %c0_1 = arith.constant 0 : index
    %c0_2 = arith.constant 0 : index
    %c0_3 = arith.constant 0 : index
    %3 = vector.load %arg1[%c0_1, %c0_2, %c0_3] : memref<3x8x16xf32, #tpu.memory_space<vmem>>, vector<1x8x16xf32>
    %4 = vector.shape_cast %3 : vector<1x8x16xf32> to vector<8x16xf32>
    %c0_4 = arith.constant 0 : index
    %c0_5 = arith.constant 0 : index
    %c0_6 = arith.constant 0 : index
    %5 = vector.load %arg2[%c0_4, %c0_5, %c0_6] : memref<3x16x32xf32, #tpu.memory_space<vmem>>, vector<1x16x32xf32>
    %6 = vector.shape_cast %5 : vector<1x16x32xf32> to vector<16x32xf32>
    %cst = arith.constant dense<0.000000e+00> : vector<8x32xf32>
    %7 = tpu.matmul %4, %6, %cst {dimension_numbers = #tpu.dot_dimension_numbers<[1], [0], [0], [1], [0, 0, 1, 1], [], []>} : vector<8x16xf32>, vector<16x32xf32>, vector<8x32xf32> -> vector<8x32xf32>
    %8 = arith.addf %2, %7 : vector<8x32xf32>
    %c1 = arith.constant 1 : index
    %c0_7 = arith.constant 0 : index
    %c0_8 = arith.constant 0 : index
    %9 = vector.load %arg1[%c1, %c0_7, %c0_8] : memref<3x8x16xf32, #tpu.memory_space<vmem>>, vector<1x8x16xf32>
    %10 = vector.shape_cast %9 : vector<1x8x16xf32> to vector<8x16xf32>
    %c1_9 = arith.constant 1 : index
    %c0_10 = arith.constant 0 : index
    %c0_11 = arith.constant 0 : index
    %11 = vector.load %arg2[%c1_9, %c0_10, %c0_11] : memref<3x16x32xf32, #tpu.memory_space<vmem>>, vector<1x16x32xf32>
    %12 = vector.shape_cast %11 : vector<1x16x32xf32> to vector<16x32xf32>
    %cst_12 = arith.constant dense<0.000000e+00> : vector<8x32xf32>
    %13 = tpu.matmul %10, %12, %cst_12 {dimension_numbers = #tpu.dot_dimension_numbers<[1], [0], [0], [1], [0, 0, 1, 1], [], []>} : vector<8x16xf32>, vector<16x32xf32>, vector<8x32xf32> -> vector<8x32xf32>
    %14 = arith.addf %8, %13 : vector<8x32xf32>
    %c2 = arith.constant 2 : index
    %c0_13 = arith.constant 0 : index
    %c0_14 = arith.constant 0 : index
    %15 = vector.load %arg1[%c2, %c0_13, %c0_14] : memref<3x8x16xf32, #tpu.memory_space<vmem>>, vector<1x8x16xf32>
    %16 = vector.shape_cast %15 : vector<1x8x16xf32> to vector<8x16xf32>
    %c2_15 = arith.constant 2 : index
    %c0_16 = arith.constant 0 : index
    %c0_17 = arith.constant 0 : index
    %17 = vector.load %arg2[%c2_15, %c0_16, %c0_17] : memref<3x16x32xf32, #tpu.memory_space<vmem>>, vector<1x16x32xf32>
    %18 = vector.shape_cast %17 : vector<1x16x32xf32> to vector<16x32xf32>
    %cst_18 = arith.constant dense<0.000000e+00> : vector<8x32xf32>
    %19 = tpu.matmul %16, %18, %cst_18 {dimension_numbers = #tpu.dot_dimension_numbers<[1], [0], [0], [1], [0, 0, 1, 1], [], []>} : vector<8x16xf32>, vector<16x32xf32>, vector<8x32xf32> -> vector<8x32xf32>
    %20 = arith.addf %14, %19 : vector<8x32xf32>
    %cst_19 = arith.constant 0.000000e+00 : f32
    %21 = vector.broadcast %cst_19 : f32 to vector<8x32xf32>
    %22 = arith.maximumf %20, %21 : vector<8x32xf32>
    %c0_20 = arith.constant 0 : index
    %c0_21 = arith.constant 0 : index
    %23 = vector.load %arg4[%c0_20, %c0_21] : memref<32x16xf32, #tpu.memory_space<vmem>>, vector<32x16xf32>
    %cst_22 = arith.constant dense<0.000000e+00> : vector<8x16xf32>
    %24 = tpu.matmul %22, %23, %cst_22 {dimension_numbers = #tpu.dot_dimension_numbers<[1], [0], [0], [1], [0, 0, 1, 1], [], []>} : vector<8x32xf32>, vector<32x16xf32>, vector<8x16xf32> -> vector<8x16xf32>
    %c0_23 = arith.constant 0 : index
    %c0_24 = arith.constant 0 : index
    %25 = vector.load %arg5[%c0_23, %c0_24] : memref<1x16xf32, #tpu.memory_space<vmem>>, vector<1x16xf32>
    %26 = vector.broadcast %25 : vector<1x16xf32> to vector<8x16xf32>
    %27 = arith.addf %24, %26 : vector<8x16xf32>
    %c0_25 = arith.constant 0 : index
    %c0_26 = arith.constant 0 : index
    %28 = vector.load %arg6[%c0_25, %c0_26] : memref<8x16xf32, #tpu.memory_space<vmem>>, vector<8x16xf32>
    tpu.vector_store %arg6[%c0_25, %c0_26], %27 {strides = array<i32>} : memref<8x16xf32, #tpu.memory_space<vmem>>, vector<8x16xf32>,
    return
  }
  func.func @transform_0(%arg0: i32) -> (i32, i32, i32) {
    %c0_i32 = arith.constant 0 : i32
    %c0_i32_0 = arith.constant 0 : i32
    %c0_i32_1 = arith.constant 0 : i32
    return %c0_i32, %arg0, %c0_i32_0 : i32, i32, i32
  }
  func.func @transform_1(%arg0: i32) -> (i32, i32, i32) {
    %c0_i32 = arith.constant 0 : i32
    %c0_i32_0 = arith.constant 0 : i32
    %c0_i32_1 = arith.constant 0 : i32
    %c0_i32_2 = arith.constant 0 : i32
    return %c0_i32, %c0_i32_0, %c0_i32_1 : i32, i32, i32
  }
  func.func @transform_2(%arg0: i32) -> (i32, i32) {
    %c0_i32 = arith.constant 0 : i32
    %c0_i32_0 = arith.constant 0 : i32
    %c0_i32_1 = arith.constant 0 : i32
    return %c0_i32, %c0_i32_0 : i32, i32
  }
  func.func @transform_3(%arg0: i32) -> (i32, i32) {
    %c0_i32 = arith.constant 0 : i32
    %c0_i32_0 = arith.constant 0 : i32
    %c0_i32_1 = arith.constant 0 : i32
    return %c0_i32, %c0_i32_0 : i32, i32
  }
  func.func @transform_4(%arg0: i32) -> (i32, i32) {
    %c0_i32 = arith.constant 0 : i32
    %c0_i32_0 = arith.constant 0 : i32
    %c0_i32_1 = arith.constant 0 : i32
    return %c0_i32, %c0_i32_0 : i32, i32
  }
  func.func @transform_5(%arg0: i32) -> (i32, i32) {
    %c0_i32 = arith.constant 0 : i32
    %c0_i32_0 = arith.constant 0 : i32
    return %arg0, %c0_i32 : i32, i32
  }
}

</mosaic_0001>

<llo_original>
// kernel: tpu_custom_call.1
$region0: #{tpu_custom_call.1}
  #allocation0 [shape = 'u32[]', space=smem, size = 0x4, offset = 0x4, fixed_abs, tag = 'smem constant byte address 0x4 - core index']
  #allocation1 [shape = 'u32[144,128]{1,0:T(1,128)}', space=vmem, size = 0x12000, scoped, tag = 'internal scratch']
  %s0 = inlined_call_operand.hbm [shape: f32[3,8,16], index: 0, kind: input, shape index: {}]
  %s1 = inlined_call_operand.vmem [shape: f32[3,16,32], index: 1, kind: input, shape index: {}]
  %s2 = inlined_call_operand.vmem [shape: f32[1,32], index: 2, kind: input, shape index: {}]
  %s3 = inlined_call_operand.vmem [shape: f32[32,16], index: 3, kind: input, shape index: {}]
  %s4 = inlined_call_operand.vmem [shape: f32[1,16], index: 4, kind: input, shape index: {}]
  %s5 = inlined_call_operand.hbm [shape: f32[8,16], index: 5, kind: output, shape index: {}]
  %s6 = sld [smem:[#allocation0]]
  $region34: #{tpu_custom_call.1} parent=0
    _
  %s8 = ssub.s32 1, %s6
  %s9 = scalar_select 0, %s8, %s6
  $region1: #{tpu_custom_call.1} parent=0
    #allocation2 [shape = 'u8[12288]{0}', space=vmem, size = 0x3000, scoped, tag = 'input window, operand 0, single buffered']
    #allocation3 [shape = 's32[1]{0}', space=sflag, size = 0x4, scoped, tag = 'scoped memory for tpu_custom_call.1']
    #allocation4 [shape = 's32[1]{0}', space=sflag, size = 0x4, scoped, tag = 'scoped memory for tpu_custom_call.1']
    #allocation5 [shape = 'u8[4096]{0}', space=vmem, size = 0x1000, scoped, tag = 'output window, operand 0, single buffered']
    %10 = vsyncpa [#allocation3], 0
    %11 = vsyncpa [#allocation4], 0
    // Predicated region
    $region2: #{tpu_custom_call.1} parent=1 // pred_check
      _
    $region3: #{tpu_custom_call.1} parent=1 // pred_check_branch
      %13 = sbr.rel (0) target = $region5
    $region4: #{tpu_custom_call.1} parent=1 // pred_region
      %s15 = ssub.s32 384, 384
      %16 = vsyncadd [#allocation3], %s15
      %s17 = sshll.u32 [#allocation2], 4
      %s18 = int_to_ptr.vmem [resolvable:$true] %s17
      %23 = dma.hbm_to_vmem [thread:$0]  %s0, 384, %s18, [#allocation3], 128, 128, 8
    $region5: #{tpu_custom_call.1} parent=1 // pred_fallthru
      _
    // Predicated region
    $region6: #{tpu_custom_call.1} parent=1 // pred_check
      _
    $region7: #{tpu_custom_call.1} parent=1 // pred_check_branch
      %25 = sbr.rel (0) target = $region9
    $region8: #{tpu_custom_call.1} parent=1 // pred_region
      _
    $region9: #{tpu_custom_call.1} parent=1 // pred_fallthru
      _
    // Predicated region
    $region10: #{tpu_custom_call.1} parent=1 // pred_check
      _
    $region11: #{tpu_custom_call.1} parent=1 // pred_check_branch
      %27 = sbr.rel (0) target = $region13
    $region12: #{tpu_custom_call.1} parent=1 // pred_region
      _
    $region13: #{tpu_custom_call.1} parent=1 // pred_fallthru
      _
    // Predicated region
    $region14: #{tpu_custom_call.1} parent=1 // pred_check
      _
    $region15: #{tpu_custom_call.1} parent=1 // pred_check_branch
      %29 = sbr.rel (0) target = $region17
    $region16: #{tpu_custom_call.1} parent=1 // pred_region
      _
    $region17: #{tpu_custom_call.1} parent=1 // pred_fallthru
      _
    // Predicated region
    $region18: #{tpu_custom_call.1} parent=1 // pred_check
      _
    $region19: #{tpu_custom_call.1} parent=1 // pred_check_branch
      %31 = sbr.rel (0) target = $region21
    $region20: #{tpu_custom_call.1} parent=1 // pred_region
      _
    $region21: #{tpu_custom_call.1} parent=1 // pred_fallthru
      _
    // Predicated region
    $region22: #{tpu_custom_call.1} parent=1 // pred_check
      _
    $region23: #{tpu_custom_call.1} parent=1 // pred_check_branch
      %33 = sbr.rel (0) target = $region25
    $region24: #{tpu_custom_call.1} parent=1 // pred_region
      %34 = dma.done [#allocation3], 384
    $region25: #{tpu_custom_call.1} parent=1 // pred_fallthru
      _
    %v35 = vld [vmem:[%s2] sm:$0x1]
    %v37 = vlaneseq
    %v38 = vshrl.u32 %v37, 7
    %v39 = vsub.s32 0, %v38
    %v40 = vrot.slane %v35, %v39
    %v42 = vld [vmem:[#allocation2] sm:$0xff]
    %v43 = vld [vmem:[%s1] sm:$0xff]
    %v44 = vld [vmem:[%s1 + $0x8] sm:$0xff]
    %vm45 = vcmask 130048
    %v47 = vsel %vm45, %v42, 0
    %49 = vmatprep.subr.mxu0 0.0
    %50 = vmatpush1.msra.mxu0 %v43
    %51 = vmatprep.subr.mxu0 0.0
    %52 = vmatpush1.msra.mxu0 %v44
    %53 = vmatprep.subr.mxu0 0.0
    %54 = vmatpush1.msra.mxu0 0.0
    %55 = vmatprep.subr.mxu0 0.0
    %56 = vmatpush1.msra.mxu0 0.0
    %57 = vmatprep.subr.mxu0 0.0
    %58 = vmatpush1.msra.mxu0 0.0
    %59 = vmatprep.subr.mxu0 0.0
    %60 = vmatpush1.msra.mxu0 0.0
    %61 = vmatprep.subr.mxu0 0.0
    %62 = vmatpush1.msra.mxu0 0.0
    %63 = vmatprep.subr.mxu0 0.0
    %64 = vmatpush1.msra.mxu0 0.0
    %65 = vmatprep.subr.mxu0 0.0
    %66 = vmatpush1.msra.mxu0 0.0
    %67 = vmatprep.subr.mxu0 0.0
    %68 = vmatpush1.msra.mxu0 0.0
    %69 = vmatprep.subr.mxu0 0.0
    %70 = vmatpush1.msra.mxu0 0.0
    %71 = vmatprep.subr.mxu0 0.0
    %72 = vmatpush1.msra.mxu0 0.0
    %73 = vmatprep.subr.mxu0 0.0
    %74 = vmatpush1.msra.mxu0 0.0
    %75 = vmatprep.subr.mxu0 0.0
    %76 = vmatpush1.msra.mxu0 0.0
    %77 = vmatprep.subr.mxu0 0.0
    %78 = vmatpush1.msra.mxu0 0.0
    %79 = vmatprep.subr.mxu0 0.0
    %80 = vmatpush1.msra.mxu0 0.0
    %81 = vmatprep.subr.mxu0 0.0
    %82 = vmatpush1.msra.mxu0 0.0
    %83 = vmatprep.subr.mxu0 0.0
    %84 = vmatpush1.msra.mxu0 0.0
    %85 = vmatprep.subr.mxu0 0.0
    %86 = vmatpush1.msra.mxu0 0.0
    %87 = vmatprep.subr.mxu0 0.0
    %88 = vmatpush1.msra.mxu0 0.0
    %89 = vmatprep.subr.mxu0 0.0
    %90 = vmatpush1.msra.mxu0 0.0
    %91 = vmatprep.subr.mxu0 0.0
    %92 = vmatpush1.msra.mxu0 0.0
    %93 = vmatprep.subr.mxu0 0.0
    %94 = vmatpush1.msra.mxu0 0.0
    %95 = vmatprep.subr.mxu0 0.0
    %96 = vmatpush1.msra.mxu0 0.0
    %97 = vmatprep.subr.mxu0 0.0
    %98 = vmatpush1.msra.mxu0 0.0
    %99 = vmatprep.subr.mxu0 0.0
    %100 = vmatpush1.msra.mxu0 0.0
    %101 = vmatprep.subr.mxu0 0.0
    %102 = vmatpush1.msra.mxu0 0.0
    %103 = vmatprep.subr.mxu0 0.0
    %104 = vmatpush1.msra.mxu0 0.0
    %105 = vmatprep.subr.mxu0 0.0
    %106 = vmatpush1.msra.mxu0 0.0
    %107 = vmatprep.subr.mxu0 0.0
    %108 = vmatpush1.msra.mxu0 0.0
    %109 = vmatprep.subr.mxu0 0.0
    %110 = vmatpush1.msra.mxu0 0.0
    %111 = vmatprep.subr.mxu0 0.0
    %112 = vmatpush1.msra.mxu0 0.0
    %113 = vmatprep.mubr.f32.mxu0 0.0
    %114 = vmatmul.mubr.f32.gmra.mrb[0].mxu0 %v47
    %v115 = vpop.f32.mrb[0].mxu0
    %v116 = vadd.f32 0.0, %v115
    %v117 = vpop.f32.mrb[0].mxu0
    %118 = vdwg.mxu0
    %v119 = vadd.f32 %v40, %v116
    %s120 = scalar_lea.vmem [#allocation2], 8
    %v121 = vld [vmem:[%s120] sm:$0xff]
    %s122 = scalar_lea.vmem %s1, 16
    %v123 = vld [vmem:[%s122] sm:$0xff]
    %v124 = vld [vmem:[%s122 + $0x8] sm:$0xff]
    %v126 = vsel %vm45, %v121, 0
    %128 = vmatprep.subr.mxu0 0.0
    %129 = vmatpush1.msra.mxu0 %v123
    %130 = vmatprep.subr.mxu0 0.0
    %131 = vmatpush1.msra.mxu0 %v124
    %132 = vmatprep.subr.mxu0 0.0
    %133 = vmatpush1.msra.mxu0 0.0
    %134 = vmatprep.subr.mxu0 0.0
    %135 = vmatpush1.msra.mxu0 0.0
    %136 = vmatprep.subr.mxu0 0.0
    %137 = vmatpush1.msra.mxu0 0.0
    %138 = vmatprep.subr.mxu0 0.0
    %139 = vmatpush1.msra.mxu0 0.0
    %140 = vmatprep.subr.mxu0 0.0
    %141 = vmatpush1.msra.mxu0 0.0
    %142 = vmatprep.subr.mxu0 0.0
    %143 = vmatpush1.msra.mxu0 0.0
    %144 = vmatprep.subr.mxu0 0.0
    %145 = vmatpush1.msra.mxu0 0.0
    %146 = vmatprep.subr.mxu0 0.0
    %147 = vmatpush1.msra.mxu0 0.0
    %148 = vmatprep.subr.mxu0 0.0
    %149 = vmatpush1.msra.mxu0 0.0
    %150 = vmatprep.subr.mxu0 0.0
    %151 = vmatpush1.msra.mxu0 0.0
    %152 = vmatprep.subr.mxu0 0.0
    %153 = vmatpush1.msra.mxu0 0.0
    %154 = vmatprep.subr.mxu0 0.0
    %155 = vmatpush1.msra.mxu0 0.0
    %156 = vmatprep.subr.mxu0 0.0
    %157 = vmatpush1.msra.mxu0 0.0
    %158 = vmatprep.subr.mxu0 0.0
    %159 = vmatpush1.msra.mxu0 0.0
    %160 = vmatprep.subr.mxu0 0.0
    %161 = vmatpush1.msra.mxu0 0.0
    %162 = vmatprep.subr.mxu0 0.0
    %163 = vmatpush1.msra.mxu0 0.0
    %164 = vmatprep.subr.mxu0 0.0
    %165 = vmatpush1.msra.mxu0 0.0
    %166 = vmatprep.subr.mxu0 0.0
    %167 = vmatpush1.msra.mxu0 0.0
    %168 = vmatprep.subr.mxu0 0.0
    %169 = vmatpush1.msra.mxu0 0.0
    %170 = vmatprep.subr.mxu0 0.0
    %171 = vmatpush1.msra.mxu0 0.0
    %172 = vmatprep.subr.mxu0 0.0
    %173 = vmatpush1.msra.mxu0 0.0
    %174 = vmatprep.subr.mxu0 0.0
    %175 = vmatpush1.msra.mxu0 0.0
    %176 = vmatprep.subr.mxu0 0.0
    %177 = vmatpush1.msra.mxu0 0.0
    %178 = vmatprep.subr.mxu0 0.0
    %179 = vmatpush1.msra.mxu0 0.0
    %180 = vmatprep.subr.mxu0 0.0
    %181 = vmatpush1.msra.mxu0 0.0
    %182 = vmatprep.subr.mxu0 0.0
    %183 = vmatpush1.msra.mxu0 0.0
    %184 = vmatprep.subr.mxu0 0.0
    %185 = vmatpush1.msra.mxu0 0.0
    %186 = vmatprep.subr.mxu0 0.0
    %187 = vmatpush1.msra.mxu0 0.0
    %188 = vmatprep.subr.mxu0 0.0
    %189 = vmatpush1.msra.mxu0 0.0
    %190 = vmatprep.subr.mxu0 0.0
    %191 = vmatpush1.msra.mxu0 0.0
    %192 = vmatprep.mubr.f32.mxu0 0.0
    %193 = vmatmul.mubr.f32.gmra.mrb[0].mxu0 %v126
    %v194 = vpop.f32.mrb[0].mxu0
    %v195 = vadd.f32 0.0, %v194
    %v196 = vpop.f32.mrb[0].mxu0
    %197 = vdwg.mxu0
    %v198 = vadd.f32 %v119, %v195
    %s199 = scalar_lea.vmem [#allocation2], 16
    %v200 = vld [vmem:[%s199] sm:$0xff]
    %s201 = scalar_lea.vmem %s1, 32
    %v202 = vld [vmem:[%s201] sm:$0xff]
    %v203 = vld [vmem:[%s201 + $0x8] sm:$0xff]
    %v205 = vsel %vm45, %v200, 0
    %207 = vmatprep.subr.mxu0 0.0
    %208 = vmatpush1.msra.mxu0 %v202
    %209 = vmatprep.subr.mxu0 0.0
    %210 = vmatpush1.msra.mxu0 %v203
    %211 = vmatprep.subr.mxu0 0.0
    %212 = vmatpush1.msra.mxu0 0.0
    %213 = vmatprep.subr.mxu0 0.0
    %214 = vmatpush1.msra.mxu0 0.0
    %215 = vmatprep.subr.mxu0 0.0
    %216 = vmatpush1.msra.mxu0 0.0
    %217 = vmatprep.subr.mxu0 0.0
    %218 = vmatpush1.msra.mxu0 0.0
    %219 = vmatprep.subr.mxu0 0.0
    %220 = vmatpush1.msra.mxu0 0.0
    %221 = vmatprep.subr.mxu0 0.0
    %222 = vmatpush1.msra.mxu0 0.0
    %223 = vmatprep.subr.mxu0 0.0
    %224 = vmatpush1.msra.mxu0 0.0
    %225 = vmatprep.subr.mxu0 0.0
    %226 = vmatpush1.msra.mxu0 0.0
    %227 = vmatprep.subr.mxu0 0.0
    %228 = vmatpush1.msra.mxu0 0.0
    %229 = vmatprep.subr.mxu0 0.0
    %230 = vmatpush1.msra.mxu0 0.0
    %231 = vmatprep.subr.mxu0 0.0
    %232 = vmatpush1.msra.mxu0 0.0
    %233 = vmatprep.subr.mxu0 0.0
    %234 = vmatpush1.msra.mxu0 0.0
    %235 = vmatprep.subr.mxu0 0.0
    %236 = vmatpush1.msra.mxu0 0.0
    %237 = vmatprep.subr.mxu0 0.0
    %238 = vmatpush1.msra.mxu0 0.0
    %239 = vmatprep.subr.mxu0 0.0
    %240 = vmatpush1.msra.mxu0 0.0
    %241 = vmatprep.subr.mxu0 0.0
    %242 = vmatpush1.msra.mxu0 0.0
    %243 = vmatprep.subr.mxu0 0.0
    %244 = vmatpush1.msra.mxu0 0.0
    %245 = vmatprep.subr.mxu0 0.0
    %246 = vmatpush1.msra.mxu0 0.0
    %247 = vmatprep.subr.mxu0 0.0
    %248 = vmatpush1.msra.mxu0 0.0
    %249 = vmatprep.subr.mxu0 0.0
    %250 = vmatpush1.msra.mxu0 0.0
    %251 = vmatprep.subr.mxu0 0.0
    %252 = vmatpush1.msra.mxu0 0.0
    %253 = vmatprep.subr.mxu0 0.0
    %254 = vmatpush1.msra.mxu0 0.0
    %255 = vmatprep.subr.mxu0 0.0
    %256 = vmatpush1.msra.mxu0 0.0
    %257 = vmatprep.subr.mxu0 0.0
    %258 = vmatpush1.msra.mxu0 0.0
    %259 = vmatprep.subr.mxu0 0.0
    %260 = vmatpush1.msra.mxu0 0.0
    %261 = vmatprep.subr.mxu0 0.0
    %262 = vmatpush1.msra.mxu0 0.0
    %263 = vmatprep.subr.mxu0 0.0
    %264 = vmatpush1.msra.mxu0 0.0
    %265 = vmatprep.subr.mxu0 0.0
    %266 = vmatpush1.msra.mxu0 0.0
    %267 = vmatprep.subr.mxu0 0.0
    %268 = vmatpush1.msra.mxu0 0.0
    %269 = vmatprep.subr.mxu0 0.0
    %270 = vmatpush1.msra.mxu0 0.0
    %271 = vmatprep.mubr.f32.mxu0 0.0
    %272 = vmatmul.mubr.f32.gmra.mrb[0].mxu0 %v205
    %v273 = vpop.f32.mrb[0].mxu0
    %v274 = vadd.f32 0.0, %v273
    %v275 = vpop.f32.mrb[0].mxu0
    %276 = vdwg.mxu0
    %v277 = vadd.f32 %v198, %v274
    %v278 = vmax.f32 %v277, 0.0
    %v279 = vld [vmem:[%s3] sm:$0xff]
    %v280 = vld [vmem:[%s3 + $0x8] sm:$0xff]
    %v281 = vld [vmem:[%s3 + $0x10] sm:$0xff]
    %v282 = vld [vmem:[%s3 + $0x18] sm:$0xff]
    %v283 = vld [vmem:[%s4] sm:$0x1]
    %v285 = vlaneseq
    %v286 = vshrl.u32 %v285, 7
    %v287 = vsub.s32 0, %v286
    %v288 = vrot.slane %v283, %v287
    %vm290 = vcmask 261120
    %v292 = vsel %vm290, %v278, 0
    %294 = vmatprep.subr.mxu0 0.0
    %295 = vmatpush1.msra.mxu0 %v279
    %296 = vmatprep.subr.mxu0 0.0
    %297 = vmatpush1.msra.mxu0 %v280
    %298 = vmatprep.subr.mxu0 0.0
    %299 = vmatpush1.msra.mxu0 %v281
    %300 = vmatprep.subr.mxu0 0.0
    %301 = vmatpush1.msra.mxu0 %v282
    %302 = vmatprep.subr.mxu0 0.0
    %303 = vmatpush1.msra.mxu0 0.0
    %304 = vmatprep.subr.mxu0 0.0
    %305 = vmatpush1.msra.mxu0 0.0
    %306 = vmatprep.subr.mxu0 0.0
    %307 = vmatpush1.msra.mxu0 0.0
    %308 = vmatprep.subr.mxu0 0.0
    %309 = vmatpush1.msra.mxu0 0.0
    %310 = vmatprep.subr.mxu0 0.0
    %311 = vmatpush1.msra.mxu0 0.0
    %312 = vmatprep.subr.mxu0 0.0
    %313 = vmatpush1.msra.mxu0 0.0
    %314 = vmatprep.subr.mxu0 0.0
    %315 = vmatpush1.msra.mxu0 0.0
    %316 = vmatprep.subr.mxu0 0.0
    %317 = vmatpush1.msra.mxu0 0.0
    %318 = vmatprep.subr.mxu0 0.0
    %319 = vmatpush1.msra.mxu0 0.0
    %320 = vmatprep.subr.mxu0 0.0
    %321 = vmatpush1.msra.mxu0 0.0
    %322 = vmatprep.subr.mxu0 0.0
    %323 = vmatpush1.msra.mxu0 0.0
    %324 = vmatprep.subr.mxu0 0.0
    %325 = vmatpush1.msra.mxu0 0.0
    %326 = vmatprep.subr.mxu0 0.0
    %327 = vmatpush1.msra.mxu0 0.0
    %328 = vmatprep.subr.mxu0 0.0
    %329 = vmatpush1.msra.mxu0 0.0
    %330 = vmatprep.subr.mxu0 0.0
    %331 = vmatpush1.msra.mxu0 0.0
    %332 = vmatprep.subr.mxu0 0.0
    %333 = vmatpush1.msra.mxu0 0.0
    %334 = vmatprep.subr.mxu0 0.0
    %335 = vmatpush1.msra.mxu0 0.0
    %336 = vmatprep.subr.mxu0 0.0
    %337 = vmatpush1.msra.mxu0 0.0
    %338 = vmatprep.subr.mxu0 0.0
    %339 = vmatpush1.msra.mxu0 0.0
    %340 = vmatprep.subr.mxu0 0.0
    %341 = vmatpush1.msra.mxu0 0.0
    %342 = vmatprep.subr.mxu0 0.0
    %343 = vmatpush1.msra.mxu0 0.0
    %344 = vmatprep.subr.mxu0 0.0
    %345 = vmatpush1.msra.mxu0 0.0
    %346 = vmatprep.subr.mxu0 0.0
    %347 = vmatpush1.msra.mxu0 0.0
    %348 = vmatprep.subr.mxu0 0.0
    %349 = vmatpush1.msra.mxu0 0.0
    %350 = vmatprep.subr.mxu0 0.0
    %351 = vmatpush1.msra.mxu0 0.0
    %352 = vmatprep.subr.mxu0 0.0
    %353 = vmatpush1.msra.mxu0 0.0
    %354 = vmatprep.subr.mxu0 0.0
    %355 = vmatpush1.msra.mxu0 0.0
    %356 = vmatprep.subr.mxu0 0.0
    %357 = vmatpush1.msra.mxu0 0.0
    %358 = vmatprep.mubr.f32.mxu0 0.0
    %359 = vmatmul.mubr.f32.gmra.mrb[0].mxu0 %v292
    %v360 = vpop.f32.mrb[0].mxu0
    %v361 = vadd.f32 %v288, %v360
    %v362 = vpop.f32.mrb[0].mxu0
    %363 = vdwg.mxu0
    %364 = vst.msk [vmem:[#allocation5] sm:$0xff] %vm45, %v361
    // Predicated region
    $region26: #{tpu_custom_call.1} parent=1 // pred_check
      _
    $region27: #{tpu_custom_call.1} parent=1 // pred_check_branch
      %366 = sbr.rel (0) target = $region29
    $region28: #{tpu_custom_call.1} parent=1 // pred_region
      %s368 = ssub.s32 128, 128
      %369 = vsyncadd [#allocation4], %s368
      %s371 = sshll.u32 [#allocation5], 4
      %s372 = int_to_ptr.vmem [resolvable:$true] %s371
      %374 = dma.vmem_to_hbm [thread:$0]  %s372, 128, %s5, [#allocation4]
    $region29: #{tpu_custom_call.1} parent=1 // pred_fallthru
      _
    // Predicated region
    $region30: #{tpu_custom_call.1} parent=1 // pred_check
      _
    $region31: #{tpu_custom_call.1} parent=1 // pred_check_branch
      %376 = sbr.rel (0) target = $region33
    $region32: #{tpu_custom_call.1} parent=1 // pred_region
      %377 = dma.done [#allocation4], 128
    $region33: #{tpu_custom_call.1} parent=1 // pred_fallthru
      _
    %378 = vsyncpa [#allocation3], 1
    %379 = vsyncpa [#allocation4], 1

</llo_original>
